<compile_context>
chip_gen: v7x
topology: tpu7x:2x2x1
jax: 0.10.0
libtpu: 0.0.40
codegen_flags: <defaults>
</compile_context>

<pallas_src>
import functools

import jax
import jax.numpy as jnp
from jax.experimental import pallas as pl
from jax.experimental.pallas import tpu as pltpu


def policy_net_kernel(x_ref, p1_ref, p2_ref, ph_ref, out_ref,
                      *, d_in, d_h1, d_h2, d_act):
    """Fused MLP + two heads.

    p1 = [W1; b1]        shape (d_in + 1, d_h1)
    p2 = [W2; b2]        shape (d_h1 + 1, d_h2)
    ph = [Wm|Ws; bm|bs]  shape (d_h2 + 1, 2*d_act)
    out = [tanh(mean_logits) | 0.1 + 0.9*sigmoid(std_logits)]  (B, 2*d_act)
    """
    x = x_ref[...]

    # Hidden MLP (activation = tanh, matching activation=nn.Tanh in PyTorch).
    h = jnp.tanh(
        jnp.dot(x, p1_ref[:d_in, :], preferred_element_type=jnp.float32)
        + p1_ref[d_in:d_in + 1, :]
    )
    h = jnp.tanh(
        jnp.dot(h, p2_ref[:d_h1, :], preferred_element_type=jnp.float32)
        + p2_ref[d_h1:d_h1 + 1, :]
    )

    # Both heads in a single fused matmul.
    logits = (
        jnp.dot(h, ph_ref[:d_h2, :], preferred_element_type=jnp.float32)
        + ph_ref[d_h2:d_h2 + 1, :]
    )
    mean = jnp.tanh(logits[:, :d_act])
    std = 0.1 + 0.9 * jax.nn.sigmoid(logits[:, d_act:])

    # Single fused store (one vst per tile; helps v5e's single store slot).
    out_ref[...] = jnp.concatenate([mean, std], axis=-1)


def policy_net_forward(x, packed, *, block_b=None):
    """x: (B, obs_dim) f32; packed: dict with p1, p2, ph (see pack_params).

    block_b=None (or >= B): single block, no grid (launch-overhead minimal).
    block_b=<multiple of 8>: batch-tiled grid, weights resident, rows parallel.
    """
    B, d_in = x.shape
    p1, p2, ph = packed["p1"], packed["p2"], packed["ph"]
    d_h1 = p1.shape[1]
    d_h2 = p2.shape[1]
    d_act = ph.shape[1] // 2

    kernel = functools.partial(
        policy_net_kernel, d_in=d_in, d_h1=d_h1, d_h2=d_h2, d_act=d_act
    )
    out_shape = jax.ShapeDtypeStruct((B, 2 * d_act), jnp.float32)

    if block_b is None or block_b >= B:
        # Whole problem is one block: no grid, no index_maps, 4 input DMAs.
        out = pl.pallas_call(kernel, out_shape=out_shape)(x, p1, p2, ph)
    else:
        assert block_b % 8 == 0 and B % block_b == 0, (
            "block_b must be a multiple of 8 and divide B")
        grid = (B // block_b,)
        out = pl.pallas_call(
            kernel,
            out_shape=out_shape,
            grid=grid,
            in_specs=[
                pl.BlockSpec((block_b, d_in), lambda i: (i, 0)),
                pl.BlockSpec(p1.shape, lambda i: (0, 0)),   # weights resident
                pl.BlockSpec(p2.shape, lambda i: (0, 0)),
                pl.BlockSpec(ph.shape, lambda i: (0, 0)),
            ],
            out_specs=pl.BlockSpec((block_b, 2 * d_act), lambda i: (i, 0)),
            compiler_params=pltpu.CompilerParams(
                dimension_semantics=("parallel",)
            ),
        )(x, p1, p2, ph)

    mean = out[:, :d_act]
    std = out[:, d_act:]
    return mean, std


def init_params(key, obs_dim, hidden_layers, action_dim):
    """Deterministic synthetic init (shapes mirror the PyTorch module,
    but weights stored (in_features, out_features) so the kernel does x@W+b)."""
    h1, h2 = hidden_layers
    ks = jax.random.split(key, 8)
    scale = 0.1
    return {
        "w1": scale * jax.random.normal(ks[0], (obs_dim, h1), jnp.float32),
        "b1": scale * jax.random.normal(ks[1], (1, h1), jnp.float32),
        "w2": scale * jax.random.normal(ks[2], (h1, h2), jnp.float32),
        "b2": scale * jax.random.normal(ks[3], (1, h2), jnp.float32),
        "wm": scale * jax.random.normal(ks[4], (h2, action_dim), jnp.float32),
        "bm": scale * jax.random.normal(ks[5], (1, action_dim), jnp.float32),
        "ws": scale * jax.random.normal(ks[6], (h2, action_dim), jnp.float32),
        "bs": scale * jax.random.normal(ks[7], (1, action_dim), jnp.float32),
    }


def pack_params(p):
    """Pack (weight, bias) pairs into single slabs and fuse the two heads."""
    p1 = jnp.concatenate([p["w1"], p["b1"]], axis=0)              # (obs+1, h1)
    p2 = jnp.concatenate([p["w2"], p["b2"]], axis=0)              # (h1+1, h2)
    w_heads = jnp.concatenate([p["wm"], p["ws"]], axis=1)         # (h2, 2A)
    b_heads = jnp.concatenate([p["bm"], p["bs"]], axis=1)         # (1, 2A)
    ph = jnp.concatenate([w_heads, b_heads], axis=0)              # (h2+1, 2A)
    return {"p1": p1, "p2": p2, "ph": ph}


def reference_forward(x, p):
    """Pure-JAX reference matching the PyTorch semantics."""
    h = jnp.tanh(x @ p["w1"] + p["b1"])
    h = jnp.tanh(h @ p["w2"] + p["b2"])
    mean = jnp.tanh(h @ p["wm"] + p["bm"])
    std = 0.1 + 0.9 * jax.nn.sigmoid(h @ p["ws"] + p["bs"])
    return mean, std


if __name__ == "__main__":
    obs_dim, hidden_layers, action_dim = 16, [32, 32], 4

    key = jax.random.PRNGKey(0)
    k_x, k_p, k_xl = jax.random.split(key, 3)
    params = init_params(k_p, obs_dim, hidden_layers, action_dim)
    packed = pack_params(params)

    # --- small batch: single-block, no-grid path ---
    batch = 8
    x = jax.random.normal(k_x, (batch, obs_dim), jnp.float32)
    mean, std = policy_net_forward(x, packed)
    mean = jax.block_until_ready(mean)
    std = jax.block_until_ready(std)

    mean_ref, std_ref = reference_forward(x, params)
    assert mean.shape == (batch, action_dim) and std.shape == (batch, action_dim)
    assert jnp.allclose(mean, mean_ref, atol=1e-5, rtol=1e-5)
    assert jnp.allclose(std, std_ref, atol=1e-5, rtol=1e-5)

    # --- larger batch: batch-tiled path (parallel grid, resident weights) ---
    batch_l, block_b = 256, 128
    xl = jax.random.normal(k_xl, (batch_l, obs_dim), jnp.float32)
    mean_l, std_l = policy_net_forward(xl, packed, block_b=block_b)
    mean_l = jax.block_until_ready(mean_l)
    std_l = jax.block_until_ready(std_l)

    mean_lr, std_lr = reference_forward(xl, params)
    assert jnp.allclose(mean_l, mean_lr, atol=1e-5, rtol=1e-5)
    assert jnp.allclose(std_l, std_lr, atol=1e-5, rtol=1e-5)

    print("KERNEL_OK")
</pallas_src>

<mosaic_0001>
module attributes {stable_mosaic.version = 11 : i64} {
  func.func @policy_net_kernel(%arg0: memref<8x16xf32, #tpu.memory_space<vmem>>, %arg1: memref<17x32xf32, #tpu.memory_space<vmem>>, %arg2: memref<33x32xf32, #tpu.memory_space<vmem>>, %arg3: memref<33x8xf32, #tpu.memory_space<vmem>>, %arg4: memref<8x8xf32, #tpu.memory_space<vmem>>) attributes {dimension_semantics = [], scalar_prefetch = 0 : i64, scratch_operands = 0 : i64, tpu.core_type = #tpu.core_type<tc>} {
    %c0 = arith.constant 0 : index
    %c0_0 = arith.constant 0 : index
    %0 = vector.load %arg0[%c0, %c0_0] : memref<8x16xf32, #tpu.memory_space<vmem>>, vector<8x16xf32>
    %c0_1 = arith.constant 0 : index
    %c0_2 = arith.constant 0 : index
    %1 = vector.load %arg1[%c0_1, %c0_2] : memref<17x32xf32, #tpu.memory_space<vmem>>, vector<16x32xf32>
    %cst = arith.constant dense<0.000000e+00> : vector<8x32xf32>
    %2 = tpu.matmul %0, %1, %cst {dimension_numbers = #tpu.dot_dimension_numbers<[1], [0], [0], [1], [0, 0, 1, 1], [], []>} : vector<8x16xf32>, vector<16x32xf32>, vector<8x32xf32> -> vector<8x32xf32>
    %c16 = arith.constant 16 : index
    %c0_3 = arith.constant 0 : index
    %3 = vector.load %arg1[%c16, %c0_3] : memref<17x32xf32, #tpu.memory_space<vmem>>, vector<1x32xf32>
    %4 = vector.broadcast %3 : vector<1x32xf32> to vector<8x32xf32>
    %5 = arith.addf %2, %4 : vector<8x32xf32>
    %6 = math.tanh %5 : vector<8x32xf32>
    %c0_4 = arith.constant 0 : index
    %c0_5 = arith.constant 0 : index
    %7 = vector.load %arg2[%c0_4, %c0_5] : memref<33x32xf32, #tpu.memory_space<vmem>>, vector<32x32xf32>
    %cst_6 = arith.constant dense<0.000000e+00> : vector<8x32xf32>
    %8 = tpu.matmul %6, %7, %cst_6 {dimension_numbers = #tpu.dot_dimension_numbers<[1], [0], [0], [1], [0, 0, 1, 1], [], []>} : vector<8x32xf32>, vector<32x32xf32>, vector<8x32xf32> -> vector<8x32xf32>
    %c32 = arith.constant 32 : index
    %c0_7 = arith.constant 0 : index
    %9 = vector.load %arg2[%c32, %c0_7] : memref<33x32xf32, #tpu.memory_space<vmem>>, vector<1x32xf32>
    %10 = vector.broadcast %9 : vector<1x32xf32> to vector<8x32xf32>
    %11 = arith.addf %8, %10 : vector<8x32xf32>
    %12 = math.tanh %11 : vector<8x32xf32>
    %c0_8 = arith.constant 0 : index
    %c0_9 = arith.constant 0 : index
    %13 = vector.load %arg3[%c0_8, %c0_9] : memref<33x8xf32, #tpu.memory_space<vmem>>, vector<32x8xf32>
    %cst_10 = arith.constant dense<0.000000e+00> : vector<8x8xf32>
    %14 = tpu.matmul %12, %13, %cst_10 {dimension_numbers = #tpu.dot_dimension_numbers<[1], [0], [0], [1], [0, 0, 1, 1], [], []>} : vector<8x32xf32>, vector<32x8xf32>, vector<8x8xf32> -> vector<8x8xf32>
    %c32_11 = arith.constant 32 : index
    %c0_12 = arith.constant 0 : index
    %15 = vector.load %arg3[%c32_11, %c0_12] : memref<33x8xf32, #tpu.memory_space<vmem>>, vector<1x8xf32>
    %16 = vector.broadcast %15 : vector<1x8xf32> to vector<8x8xf32>
    %17 = arith.addf %14, %16 : vector<8x8xf32>
    %18 = vector.extract_strided_slice %17 {offsets = [0, 0], sizes = [8, 4], strides = [1, 1]} : vector<8x8xf32> to vector<8x4xf32>
    %19 = math.tanh %18 : vector<8x4xf32>
    %20 = vector.extract_strided_slice %17 {offsets = [0, 4], sizes = [8, 4], strides = [1, 1]} : vector<8x8xf32> to vector<8x4xf32>
    %21 = arith.negf %20 : vector<8x4xf32>
    %22 = math.exp %21 : vector<8x4xf32>
    %cst_13 = arith.constant 1.000000e+00 : f32
    %23 = vector.broadcast %cst_13 : f32 to vector<8x4xf32>
    %24 = arith.addf %23, %22 : vector<8x4xf32>
    %25 = arith.divf %23, %24 : vector<8x4xf32>
    %cst_14 = arith.constant 0.899999976 : f32
    %26 = vector.broadcast %cst_14 : f32 to vector<8x4xf32>
    %27 = arith.mulf %26, %25 : vector<8x4xf32>
    %cst_15 = arith.constant 1.000000e-01 : f32
    %28 = vector.broadcast %cst_15 : f32 to vector<8x4xf32>
    %29 = arith.addf %28, %27 : vector<8x4xf32>
    %30 = tpu.concatenate %19, %29 in 1 : vector<8x4xf32>, vector<8x4xf32> -> vector<8x8xf32>
    %c0_16 = arith.constant 0 : index
    %c0_17 = arith.constant 0 : index
    %31 = vector.load %arg4[%c0_16, %c0_17] : memref<8x8xf32, #tpu.memory_space<vmem>>, vector<8x8xf32>
    tpu.vector_store %arg4[%c0_16, %c0_17], %30 {strides = array<i32>} : memref<8x8xf32, #tpu.memory_space<vmem>>, vector<8x8xf32>,
    return
  }
}

</mosaic_0001>

<llo_original>
// kernel: tpu_custom_call.1
$region0: #{tpu_custom_call.1}
  #allocation0 [shape = 'u32[]', space=smem, size = 0x4, offset = 0x4, fixed_abs, tag = 'smem constant byte address 0x4 - core index']
  #allocation1 [shape = 'u32[144,128]{1,0:T(1,128)}', space=vmem, size = 0x12000, scoped, tag = 'internal scratch']
  %s0 = inlined_call_operand.vmem [shape: f32[8,16], index: 0, kind: input, shape index: {}]
  %s1 = inlined_call_operand.vmem [shape: f32[17,32], index: 1, kind: input, shape index: {}]
  %s2 = inlined_call_operand.vmem [shape: f32[33,32], index: 2, kind: input, shape index: {}]
  %s3 = inlined_call_operand.vmem [shape: f32[33,8], index: 3, kind: input, shape index: {}]
  %s4 = inlined_call_operand.hbm [shape: f32[8,8], index: 4, kind: output, shape index: {}]
  %s5 = sld [smem:[#allocation0]]
  $region26: #{tpu_custom_call.1} parent=0
    _
  %s7 = ssub.s32 1, %s5
  %s8 = scalar_select 0, %s7, %s5
  $region1: #{tpu_custom_call.1} parent=0
    #allocation2 [shape = 'u8[4096]{0}', space=vmem, size = 0x1000, scoped, tag = 'output window, operand 0, single buffered']
    #allocation3 [shape = 's32[1]{0}', space=sflag, size = 0x4, scoped, tag = 'scoped memory for tpu_custom_call.1']
    %9 = vsyncpa [#allocation3], 0
    // Predicated region
    $region2: #{tpu_custom_call.1} parent=1 // pred_check
      _
    $region3: #{tpu_custom_call.1} parent=1 // pred_check_branch
      %11 = sbr.rel (0) target = $region5
    $region4: #{tpu_custom_call.1} parent=1 // pred_region
      _
    $region5: #{tpu_custom_call.1} parent=1 // pred_fallthru
      _
    // Predicated region
    $region6: #{tpu_custom_call.1} parent=1 // pred_check
      _
    $region7: #{tpu_custom_call.1} parent=1 // pred_check_branch
      %13 = sbr.rel (0) target = $region9
    $region8: #{tpu_custom_call.1} parent=1 // pred_region
      _
    $region9: #{tpu_custom_call.1} parent=1 // pred_fallthru
      _
    // Predicated region
    $region10: #{tpu_custom_call.1} parent=1 // pred_check
      _
    $region11: #{tpu_custom_call.1} parent=1 // pred_check_branch
      %15 = sbr.rel (0) target = $region13
    $region12: #{tpu_custom_call.1} parent=1 // pred_region
      _
    $region13: #{tpu_custom_call.1} parent=1 // pred_fallthru
      _
    // Predicated region
    $region14: #{tpu_custom_call.1} parent=1 // pred_check
      _
    $region15: #{tpu_custom_call.1} parent=1 // pred_check_branch
      %17 = sbr.rel (0) target = $region17
    $region16: #{tpu_custom_call.1} parent=1 // pred_region
      _
    $region17: #{tpu_custom_call.1} parent=1 // pred_fallthru
      _
    %v18 = vld [vmem:[%s0] sm:$0xff]
    %v19 = vld [vmem:[%s1] sm:$0xff]
    %v20 = vld [vmem:[%s1 + $0x8] sm:$0xff]
    %v21 = vld [vmem:[%s1 + $0x10] sm:$0x1]
    %v22 = vlaneseq
    %v23 = vshrl.u32 %v22, 7
    %v24 = vsub.s32 0, %v23
    %v25 = vrot.slane %v21, %v24
    %vm26 = vcmask 130048
    %v28 = vsel %vm26, %v18, 0
    %30 = vmatprep.subr.mxu0 0.0
    %31 = vmatpush1.msra.mxu0 %v19
    %32 = vmatprep.subr.mxu0 0.0
    %33 = vmatpush1.msra.mxu0 %v20
    %34 = vmatprep.subr.mxu0 0.0
    %35 = vmatpush1.msra.mxu0 0.0
    %36 = vmatprep.subr.mxu0 0.0
    %37 = vmatpush1.msra.mxu0 0.0
    %38 = vmatprep.subr.mxu0 0.0
    %39 = vmatpush1.msra.mxu0 0.0
    %40 = vmatprep.subr.mxu0 0.0
    %41 = vmatpush1.msra.mxu0 0.0
    %42 = vmatprep.subr.mxu0 0.0
    %43 = vmatpush1.msra.mxu0 0.0
    %44 = vmatprep.subr.mxu0 0.0
    %45 = vmatpush1.msra.mxu0 0.0
    %46 = vmatprep.subr.mxu0 0.0
    %47 = vmatpush1.msra.mxu0 0.0
    %48 = vmatprep.subr.mxu0 0.0
    %49 = vmatpush1.msra.mxu0 0.0
    %50 = vmatprep.subr.mxu0 0.0
    %51 = vmatpush1.msra.mxu0 0.0
    %52 = vmatprep.subr.mxu0 0.0
    %53 = vmatpush1.msra.mxu0 0.0
    %54 = vmatprep.subr.mxu0 0.0
    %55 = vmatpush1.msra.mxu0 0.0
    %56 = vmatprep.subr.mxu0 0.0
    %57 = vmatpush1.msra.mxu0 0.0
    %58 = vmatprep.subr.mxu0 0.0
    %59 = vmatpush1.msra.mxu0 0.0
    %60 = vmatprep.subr.mxu0 0.0
    %61 = vmatpush1.msra.mxu0 0.0
    %62 = vmatprep.subr.mxu0 0.0
    %63 = vmatpush1.msra.mxu0 0.0
    %64 = vmatprep.subr.mxu0 0.0
    %65 = vmatpush1.msra.mxu0 0.0
    %66 = vmatprep.subr.mxu0 0.0
    %67 = vmatpush1.msra.mxu0 0.0
    %68 = vmatprep.subr.mxu0 0.0
    %69 = vmatpush1.msra.mxu0 0.0
    %70 = vmatprep.subr.mxu0 0.0
    %71 = vmatpush1.msra.mxu0 0.0
    %72 = vmatprep.subr.mxu0 0.0
    %73 = vmatpush1.msra.mxu0 0.0
    %74 = vmatprep.subr.mxu0 0.0
    %75 = vmatpush1.msra.mxu0 0.0
    %76 = vmatprep.subr.mxu0 0.0
    %77 = vmatpush1.msra.mxu0 0.0
    %78 = vmatprep.subr.mxu0 0.0
    %79 = vmatpush1.msra.mxu0 0.0
    %80 = vmatprep.subr.mxu0 0.0
    %81 = vmatpush1.msra.mxu0 0.0
    %82 = vmatprep.subr.mxu0 0.0
    %83 = vmatpush1.msra.mxu0 0.0
    %84 = vmatprep.subr.mxu0 0.0
    %85 = vmatpush1.msra.mxu0 0.0
    %86 = vmatprep.subr.mxu0 0.0
    %87 = vmatpush1.msra.mxu0 0.0
    %88 = vmatprep.subr.mxu0 0.0
    %89 = vmatpush1.msra.mxu0 0.0
    %90 = vmatprep.subr.mxu0 0.0
    %91 = vmatpush1.msra.mxu0 0.0
    %92 = vmatprep.subr.mxu0 0.0
    %93 = vmatpush1.msra.mxu0 0.0
    %94 = vmatprep.mubr.f32.mxu0 0.0
    %95 = vmatmul.mubr.f32.gmra.mrb[0].mxu0 %v28
    %v96 = vpop.f32.mrb[0].mxu0
    %v97 = vadd.f32 %v25, %v96
    %v98 = vpop.f32.mrb[0].mxu0
    %99 = vdwg.mxu0
    %v100 = vtanh.pop %v97
    %v101 = vld [vmem:[%s2] sm:$0xff]
    %v102 = vld [vmem:[%s2 + $0x8] sm:$0xff]
    %v103 = vld [vmem:[%s2 + $0x10] sm:$0xff]
    %v104 = vld [vmem:[%s2 + $0x18] sm:$0xff]
    %v105 = vld [vmem:[%s2 + $0x20] sm:$0x1]
    %v106 = vlaneseq
    %v107 = vshrl.u32 %v106, 7
    %v108 = vsub.s32 0, %v107
    %v109 = vrot.slane %v105, %v108
    %vm110 = vcmask 261120
    %v112 = vsel %vm110, %v100, 0
    %114 = vmatprep.subr.mxu0 0.0
    %115 = vmatpush1.msra.mxu0 %v101
    %116 = vmatprep.subr.mxu0 0.0
    %117 = vmatpush1.msra.mxu0 %v102
    %118 = vmatprep.subr.mxu0 0.0
    %119 = vmatpush1.msra.mxu0 %v103
    %120 = vmatprep.subr.mxu0 0.0
    %121 = vmatpush1.msra.mxu0 %v104
    %122 = vmatprep.subr.mxu0 0.0
    %123 = vmatpush1.msra.mxu0 0.0
    %124 = vmatprep.subr.mxu0 0.0
    %125 = vmatpush1.msra.mxu0 0.0
    %126 = vmatprep.subr.mxu0 0.0
    %127 = vmatpush1.msra.mxu0 0.0
    %128 = vmatprep.subr.mxu0 0.0
    %129 = vmatpush1.msra.mxu0 0.0
    %130 = vmatprep.subr.mxu0 0.0
    %131 = vmatpush1.msra.mxu0 0.0
    %132 = vmatprep.subr.mxu0 0.0
    %133 = vmatpush1.msra.mxu0 0.0
    %134 = vmatprep.subr.mxu0 0.0
    %135 = vmatpush1.msra.mxu0 0.0
    %136 = vmatprep.subr.mxu0 0.0
    %137 = vmatpush1.msra.mxu0 0.0
    %138 = vmatprep.subr.mxu0 0.0
    %139 = vmatpush1.msra.mxu0 0.0
    %140 = vmatprep.subr.mxu0 0.0
    %141 = vmatpush1.msra.mxu0 0.0
    %142 = vmatprep.subr.mxu0 0.0
    %143 = vmatpush1.msra.mxu0 0.0
    %144 = vmatprep.subr.mxu0 0.0
    %145 = vmatpush1.msra.mxu0 0.0
    %146 = vmatprep.subr.mxu0 0.0
    %147 = vmatpush1.msra.mxu0 0.0
    %148 = vmatprep.subr.mxu0 0.0
    %149 = vmatpush1.msra.mxu0 0.0
    %150 = vmatprep.subr.mxu0 0.0
    %151 = vmatpush1.msra.mxu0 0.0
    %152 = vmatprep.subr.mxu0 0.0
    %153 = vmatpush1.msra.mxu0 0.0
    %154 = vmatprep.subr.mxu0 0.0
    %155 = vmatpush1.msra.mxu0 0.0
    %156 = vmatprep.subr.mxu0 0.0
    %157 = vmatpush1.msra.mxu0 0.0
    %158 = vmatprep.subr.mxu0 0.0
    %159 = vmatpush1.msra.mxu0 0.0
    %160 = vmatprep.subr.mxu0 0.0
    %161 = vmatpush1.msra.mxu0 0.0
    %162 = vmatprep.subr.mxu0 0.0
    %163 = vmatpush1.msra.mxu0 0.0
    %164 = vmatprep.subr.mxu0 0.0
    %165 = vmatpush1.msra.mxu0 0.0
    %166 = vmatprep.subr.mxu0 0.0
    %167 = vmatpush1.msra.mxu0 0.0
    %168 = vmatprep.subr.mxu0 0.0
    %169 = vmatpush1.msra.mxu0 0.0
    %170 = vmatprep.subr.mxu0 0.0
    %171 = vmatpush1.msra.mxu0 0.0
    %172 = vmatprep.subr.mxu0 0.0
    %173 = vmatpush1.msra.mxu0 0.0
    %174 = vmatprep.subr.mxu0 0.0
    %175 = vmatpush1.msra.mxu0 0.0
    %176 = vmatprep.subr.mxu0 0.0
    %177 = vmatpush1.msra.mxu0 0.0
    %178 = vmatprep.mubr.f32.mxu0 0.0
    %179 = vmatmul.mubr.f32.gmra.mrb[0].mxu0 %v112
    %v180 = vpop.f32.mrb[0].mxu0
    %v181 = vadd.f32 %v109, %v180
    %v182 = vpop.f32.mrb[0].mxu0
    %183 = vdwg.mxu0
    %v184 = vtanh.pop %v181
    %v185 = vld [vmem:[%s3] sm:$0xff]
    %v186 = vld [vmem:[%s3 + $0x8] sm:$0xff]
    %v187 = vld [vmem:[%s3 + $0x10] sm:$0xff]
    %v188 = vld [vmem:[%s3 + $0x18] sm:$0xff]
    %v189 = vld [vmem:[%s3 + $0x20] sm:$0x1]
    %v190 = vlaneseq
    %v191 = vshrl.u32 %v190, 7
    %v192 = vsub.s32 0, %v191
    %v193 = vrot.slane %v189, %v192
    %v195 = vsel %vm110, %v184, 0
    %197 = vmatprep.subr.mxu0 0.0
    %198 = vmatpush1.msra.mxu0 %v185
    %199 = vmatprep.subr.mxu0 0.0
    %200 = vmatpush1.msra.mxu0 %v186
    %201 = vmatprep.subr.mxu0 0.0
    %202 = vmatpush1.msra.mxu0 %v187
    %203 = vmatprep.subr.mxu0 0.0
    %204 = vmatpush1.msra.mxu0 %v188
    %205 = vmatprep.subr.mxu0 0.0
    %206 = vmatpush1.msra.mxu0 0.0
    %207 = vmatprep.subr.mxu0 0.0
    %208 = vmatpush1.msra.mxu0 0.0
    %209 = vmatprep.subr.mxu0 0.0
    %210 = vmatpush1.msra.mxu0 0.0
    %211 = vmatprep.subr.mxu0 0.0
    %212 = vmatpush1.msra.mxu0 0.0
    %213 = vmatprep.subr.mxu0 0.0
    %214 = vmatpush1.msra.mxu0 0.0
    %215 = vmatprep.subr.mxu0 0.0
    %216 = vmatpush1.msra.mxu0 0.0
    %217 = vmatprep.subr.mxu0 0.0
    %218 = vmatpush1.msra.mxu0 0.0
    %219 = vmatprep.subr.mxu0 0.0
    %220 = vmatpush1.msra.mxu0 0.0
    %221 = vmatprep.subr.mxu0 0.0
    %222 = vmatpush1.msra.mxu0 0.0
    %223 = vmatprep.subr.mxu0 0.0
    %224 = vmatpush1.msra.mxu0 0.0
    %225 = vmatprep.subr.mxu0 0.0
    %226 = vmatpush1.msra.mxu0 0.0
    %227 = vmatprep.subr.mxu0 0.0
    %228 = vmatpush1.msra.mxu0 0.0
    %229 = vmatprep.subr.mxu0 0.0
    %230 = vmatpush1.msra.mxu0 0.0
    %231 = vmatprep.subr.mxu0 0.0
    %232 = vmatpush1.msra.mxu0 0.0
    %233 = vmatprep.subr.mxu0 0.0
    %234 = vmatpush1.msra.mxu0 0.0
    %235 = vmatprep.subr.mxu0 0.0
    %236 = vmatpush1.msra.mxu0 0.0
    %237 = vmatprep.subr.mxu0 0.0
    %238 = vmatpush1.msra.mxu0 0.0
    %239 = vmatprep.subr.mxu0 0.0
    %240 = vmatpush1.msra.mxu0 0.0
    %241 = vmatprep.subr.mxu0 0.0
    %242 = vmatpush1.msra.mxu0 0.0
    %243 = vmatprep.subr.mxu0 0.0
    %244 = vmatpush1.msra.mxu0 0.0
    %245 = vmatprep.subr.mxu0 0.0
    %246 = vmatpush1.msra.mxu0 0.0
    %247 = vmatprep.subr.mxu0 0.0
    %248 = vmatpush1.msra.mxu0 0.0
    %249 = vmatprep.subr.mxu0 0.0
    %250 = vmatpush1.msra.mxu0 0.0
    %251 = vmatprep.subr.mxu0 0.0
    %252 = vmatpush1.msra.mxu0 0.0
    %253 = vmatprep.subr.mxu0 0.0
    %254 = vmatpush1.msra.mxu0 0.0
    %255 = vmatprep.subr.mxu0 0.0
    %256 = vmatpush1.msra.mxu0 0.0
    %257 = vmatprep.subr.mxu0 0.0
    %258 = vmatpush1.msra.mxu0 0.0
    %259 = vmatprep.subr.mxu0 0.0
    %260 = vmatpush1.msra.mxu0 0.0
    %261 = vmatprep.mubr.f32.mxu0 0.0
    %262 = vmatmul.mubr.f32.gmra.mrb[0].mxu0 %v195
    %v263 = vpop.f32.mrb[0].mxu0
    %v264 = vadd.f32 %v193, %v263
    %v265 = vpop.f32.mrb[0].mxu0
    %266 = vdwg.mxu0
    %v267 = vtanh.pop %v264
    %v268 = vxor.u32 %v264, 2147483648
    %v269 = vmul.f32 %v268, 1.442695
    %v270 = vpow.pop %v269
    %v271 = vadd.f32 %v270, 1.0
    %v272 = vrcp.pop %v271
    %v273 = vmul.f32 1.0, %v272
    %v274 = vmul.f32 %v273, 0.9
    %v275 = vadd.f32 %v274, 0.1
    %vm276 = vcmask 31744
    %v277 = vsel %vm276, %v267, %v275
    %vm278 = vcmask 64512
    %279 = vst.msk [vmem:[#allocation2] sm:$0xff] %vm278, %v277
    // Predicated region
    $region18: #{tpu_custom_call.1} parent=1 // pred_check
      _
    $region19: #{tpu_custom_call.1} parent=1 // pred_check_branch
      %281 = sbr.rel (0) target = $region21
    $region20: #{tpu_custom_call.1} parent=1 // pred_region
      %s283 = ssub.s32 128, 128
      %284 = vsyncadd [#allocation3], %s283
      %s286 = sshll.u32 [#allocation2], 4
      %s287 = int_to_ptr.vmem [resolvable:$true] %s286
      %289 = dma.vmem_to_hbm [thread:$0]  %s287, 128, %s4, [#allocation3]
    $region21: #{tpu_custom_call.1} parent=1 // pred_fallthru
      _
    // Predicated region
    $region22: #{tpu_custom_call.1} parent=1 // pred_check
      _
    $region23: #{tpu_custom_call.1} parent=1 // pred_check_branch
      %291 = sbr.rel (0) target = $region25
    $region24: #{tpu_custom_call.1} parent=1 // pred_region
      %292 = dma.done [#allocation3], 128
    $region25: #{tpu_custom_call.1} parent=1 // pred_fallthru
      _
    %293 = vsyncpa [#allocation3], 1

</llo_original>
